<compile_context>
chip_gen: v7x
topology: tpu7x:2x2x1
jax: 0.10.0
libtpu: 0.0.40
codegen_flags: <defaults>
</compile_context>

<pallas_src>
import functools

import jax
import jax.numpy as jnp
import numpy as np
from jax.experimental import pallas as pl
from jax.experimental.pallas import tpu as pltpu


def _round_up(a, b):
    return (a + b - 1) // b * b


def _ldt_loss_kernel(x_ref, side_ref, out_ref, *, n_valid, tile_n):
    i = pl.program_id(0)

    x = x_ref[...].astype(jnp.float32)         # (T, C)  cast after the VMEM load
    side = side_ref[...]                       # (T, 2)  f32 side data
    dt = side[:, 0:1]                          # Delta[target]        (pre-gathered)
    s_tgt = side[:, 1:2]                       # x[target]*Delta[target] (pre-gathered)

    # ldt_output = x * Delta[target]  (row-wise scale)
    scaled = x * dt

    # Numerically-stable CE: loss_i = logsumexp(scaled_i) - scaled_i[target_i]
    m = jnp.max(scaled, axis=-1, keepdims=True)
    lse = m + jnp.log(jnp.sum(jnp.exp(scaled - m), axis=-1, keepdims=True))
    losses = lse - s_tgt                                         # (T, 1)

    # Zero out rows that belong to the ragged (out-of-bounds) part of the tile.
    row = i * tile_n + jax.lax.broadcasted_iota(jnp.int32, (tile_n, 1), 0)
    losses = jnp.where(row < n_valid, losses, 0.0)

    # Lane/sublane-dense per-tile partial sum (reduced in the wrapper).
    out_ref[...] = jnp.broadcast_to(jnp.sum(losses), (1, 8, 128))


def ldt_loss(x, target, delta_list, gamma=0.5, reduction=None, tile_n=None):
    """x: [N, C] float (f32/bf16), target: [N] int, delta_list: [C] float."""
    x = jnp.asarray(x)                         # keep native dtype (no HBM upcast)
    target = jnp.asarray(target, jnp.int32)
    delta_list = jnp.asarray(delta_list, jnp.float32)

    n, c = x.shape

    # Parameter preprocessing (LDTLoss.__init__) + O(N) gathers, pure-JAX glue.
    delta = jnp.power(delta_list, gamma)
    delta = delta.shape[0] * delta / jnp.sum(delta)
    delta_t = delta[target]                                      # (N,) f32
    x_tgt = jnp.take_along_axis(x, target[:, None], axis=1)[:, 0].astype(jnp.float32)
    side = jnp.stack([delta_t, x_tgt * delta_t], axis=1).astype(jnp.float32)  # (N, 2)

    # ---------------- tiling (no padding of x) ----------------
    itemsize = int(jnp.dtype(x.dtype).itemsize)
    row_align = 32 if itemsize < 4 else 8      # bf16 packs 2 rows / sublane

    try:
        vmem_cap = int(getattr(pltpu.get_tpu_info(), "vmem_capacity_bytes",
                               128 * 1024 * 1024))
    except Exception:
        vmem_cap = 128 * 1024 * 1024

    if vmem_cap <= 64 * 1024 * 1024:           # v7x-class part (64 MiB VMEM / TC)
        budget_f32 = 4 * 1024 * 1024
        vmem_limit = 44 * 1024 * 1024
    else:                                       # v5e / v6e (128 MiB VMEM)
        budget_f32 = 8 * 1024 * 1024
        vmem_limit = 80 * 1024 * 1024

    # Footprint per row in VMEM is lane-padded (C -> multiple of 128).  The body
    # holds ~3 f32 temporaries of tile size plus the 2x double-buffered native-
    # dtype input, so the total stays ~5-6x budget_f32 -- well under vmem_limit.
    per_row_f32 = _round_up(c, 128) * 4
    if tile_n is None:
        tile_n = budget_f32 // per_row_f32
    tile_n = max(row_align, (int(tile_n) // row_align) * row_align)
    if tile_n >= n:
        tile_n = _round_up(n, row_align)
    num_tiles = (n + tile_n - 1) // tile_n

    kernel = functools.partial(_ldt_loss_kernel, n_valid=n, tile_n=tile_n)

    partials = pl.pallas_call(
        kernel,
        out_shape=jax.ShapeDtypeStruct((num_tiles, 8, 128), jnp.float32),
        grid_spec=pl.GridSpec(
            grid=(num_tiles,),
            in_specs=[
                pl.BlockSpec((tile_n, c), lambda i: (i, 0)),     # x (full class dim)
                pl.BlockSpec((tile_n, 2), lambda i: (i, 0)),     # [Delta[t], x[t]*Delta[t]]
            ],
            out_specs=pl.BlockSpec((1, 8, 128), lambda i: (i, 0, 0)),
        ),
        compiler_params=pltpu.CompilerParams(
            # TODO(synk): on v7x, verify in the trace that both TensorCores split
            # this axis; if not, switch to pltpu.CORE_PARALLEL on a leading axis.
            dimension_semantics=("parallel",),
            vmem_limit_bytes=vmem_limit,
        ),
    )(x, side)

    total = jnp.sum(partials[:, 0, 0])
    if reduction == "sum":
        return total
    return total / jnp.float32(n)              # F.cross_entropy default: mean


def _reference(x, target, delta_list, gamma=0.5, reduction=None):
    x = np.asarray(x, np.float64)
    t = np.asarray(target)
    delta = np.power(np.asarray(delta_list, np.float64), gamma)
    delta = delta.shape[0] * delta / delta.sum()
    scaled = x * delta[t][:, None]
    m = scaled.max(axis=-1, keepdims=True)
    lse = m[:, 0] + np.log(np.exp(scaled - m).sum(axis=-1))
    losses = lse - scaled[np.arange(x.shape[0]), t]
    return losses.sum() if reduction == "sum" else losses.mean()


if __name__ == "__main__":
    key = jax.random.PRNGKey(0)
    ok = True

    # Case 1: small shapes matching the module's typical use (N=8 rows, C=4 classes).
    k1, k2 = jax.random.split(key)
    N, C = 8, 4
    x = jax.random.normal(k1, (N, C), dtype=jnp.float32)
    target = jax.random.randint(k2, (N,), 0, C, dtype=jnp.int32)
    delta_list = jnp.array([10.0, 5.0, 2.0, 1.0], dtype=jnp.float32)
    for red in (None, "sum"):
        out = jax.block_until_ready(
            ldt_loss(x, target, delta_list, gamma=0.5, reduction=red))
        ref = _reference(np.asarray(x), np.asarray(target), np.asarray(delta_list),
                         gamma=0.5, reduction=red)
        ok &= bool(np.allclose(np.asarray(out), ref, rtol=1e-5, atol=1e-5))

    # Case 2: ragged batch + multi-tile grid (forced tile_n=8) + non-128 class dim.
    k3, k4 = jax.random.split(k1)
    N2, C2 = 37, 10
    x2 = jax.random.normal(k3, (N2, C2), dtype=jnp.float32)
    t2 = jax.random.randint(k4, (N2,), 0, C2, dtype=jnp.int32)
    dl2 = jnp.linspace(20.0, 1.0, C2, dtype=jnp.float32)
    for red in (None, "sum"):
        out = jax.block_until_ready(
            ldt_loss(x2, t2, dl2, gamma=0.5, reduction=red, tile_n=8))
        ref = _reference(np.asarray(x2), np.asarray(t2), np.asarray(dl2),
                         gamma=0.5, reduction=red)
        ok &= bool(np.allclose(np.asarray(out), ref, rtol=1e-5, atol=1e-5))

    # Case 3: bf16 input (half HBM bytes, 32-row tile alignment), single ragged tile.
    k5, k6 = jax.random.split(k3)
    N3, C3 = 50, 16
    x3 = jax.random.normal(k5, (N3, C3), dtype=jnp.float32).astype(jnp.bfloat16)
    t3 = jax.random.randint(k6, (N3,), 0, C3, dtype=jnp.int32)
    dl3 = jnp.linspace(8.0, 1.0, C3, dtype=jnp.float32)
    out = jax.block_until_ready(ldt_loss(x3, t3, dl3, gamma=0.5))
    ref = _reference(np.asarray(x3.astype(jnp.float32)), np.asarray(t3),
                     np.asarray(dl3), gamma=0.5)
    ok &= bool(np.allclose(np.asarray(out), ref, rtol=5e-2, atol=5e-2))

    if ok:
        print("KERNEL_OK")
</pallas_src>

<mosaic_0001>
module attributes {stable_mosaic.version = 11 : i64} {
  func.func @_ldt_loss_kernel(%arg0: i32, %arg1: memref<8x4xf32, #tpu.memory_space<vmem>>, %arg2: memref<8x2xf32, #tpu.memory_space<vmem>>, %arg3: memref<1x8x128xf32, #tpu.memory_space<vmem>>) attributes {dimension_semantics = [#tpu.dimension_semantics<parallel>], iteration_bounds = array<i64: 1>, scalar_prefetch = 0 : i64, scratch_operands = 0 : i64, tpu.core_type = #tpu.core_type<tc>, window_params = [{transform_indices = @transform_0, window_bounds = array<i64: 8, 4>}, {transform_indices = @transform_1, window_bounds = array<i64: 8, 2>}, {transform_indices = @transform_2, window_bounds = array<i64: 1, 8, 128>}]} {
    %c0 = arith.constant 0 : index
    %c0_0 = arith.constant 0 : index
    %0 = vector.load %arg1[%c0, %c0_0] : memref<8x4xf32, #tpu.memory_space<vmem>>, vector<8x4xf32>
    %c0_1 = arith.constant 0 : index
    %c0_2 = arith.constant 0 : index
    %1 = vector.load %arg2[%c0_1, %c0_2] : memref<8x2xf32, #tpu.memory_space<vmem>>, vector<8x2xf32>
    %2 = vector.extract_strided_slice %1 {offsets = [0, 0], sizes = [8, 1], strides = [1, 1]} : vector<8x2xf32> to vector<8x1xf32>
    %3 = vector.extract_strided_slice %1 {offsets = [0, 1], sizes = [8, 1], strides = [1, 1]} : vector<8x2xf32> to vector<8x1xf32>
    %4 = vector.broadcast %2 : vector<8x1xf32> to vector<8x4xf32>
    %5 = arith.mulf %0, %4 : vector<8x4xf32>
    %cst = arith.constant dense<0xFF800000> : vector<8xf32>
    %6 = vector.multi_reduction <maximumf>, %5, %cst [1] : vector<8x4xf32> to vector<8xf32>
    %7 = vector.shape_cast %6 : vector<8xf32> to vector<8x1xf32>
    %8 = vector.broadcast %7 : vector<8x1xf32> to vector<8x4xf32>
    %9 = arith.subf %5, %8 : vector<8x4xf32>
    %10 = math.exp %9 : vector<8x4xf32>
    %cst_3 = arith.constant dense<0.000000e+00> : vector<8xf32>
    %11 = vector.multi_reduction <add>, %10, %cst_3 [1] : vector<8x4xf32> to vector<8xf32>
    %12 = vector.shape_cast %11 : vector<8xf32> to vector<8x1xf32>
    %13 = math.log %12 : vector<8x1xf32>
    %14 = arith.addf %7, %13 : vector<8x1xf32>
    %15 = arith.subf %14, %3 : vector<8x1xf32>
    %c8_i32 = arith.constant 8 : i32
    %16 = arith.muli %arg0, %c8_i32 : i32
    %17 = tpu.iota {dimensions = array<i32: 0>} : vector<8x1xi32>
    %18 = vector.broadcast %16 : i32 to vector<8x1xi32>
    %19 = arith.addi %18, %17 : vector<8x1xi32>
    %c8_i32_4 = arith.constant 8 : i32
    %20 = vector.broadcast %c8_i32_4 : i32 to vector<8x1xi32>
    %21 = arith.cmpi slt, %19, %20 : vector<8x1xi32>
    %cst_5 = arith.constant 0.000000e+00 : f32
    %22 = vector.broadcast %cst_5 : f32 to vector<8x1xf32>
    %23 = arith.select %21, %15, %22 : vector<8x1xi1>, vector<8x1xf32>
    %24 = vector.shape_cast %23 : vector<8x1xf32> to vector<1x8x1xf32>
    %cst_6 = arith.constant dense<0.000000e+00> : vector<1xf32>
    %25 = vector.multi_reduction <add>, %24, %cst_6 [1, 2] : vector<1x8x1xf32> to vector<1xf32>
    %26 = vector.shape_cast %25 : vector<1xf32> to vector<1x1x1xf32>
    %27 = vector.extract %26[0, 0, 0] : f32 from vector<1x1x1xf32>
    %28 = vector.broadcast %27 : f32 to vector<1x8x128xf32>
    %c0_7 = arith.constant 0 : index
    %c0_8 = arith.constant 0 : index
    %c0_9 = arith.constant 0 : index
    %29 = vector.load %arg3[%c0_7, %c0_8, %c0_9] : memref<1x8x128xf32, #tpu.memory_space<vmem>>, vector<1x8x128xf32>
    tpu.vector_store %arg3[%c0_7, %c0_8, %c0_9], %28 {strides = array<i32>} : memref<1x8x128xf32, #tpu.memory_space<vmem>>, vector<1x8x128xf32>,
    return
  }
  func.func @transform_0(%arg0: i32) -> (i32, i32) {
    %c0_i32 = arith.constant 0 : i32
    %c0_i32_0 = arith.constant 0 : i32
    return %arg0, %c0_i32 : i32, i32
  }
  func.func @transform_1(%arg0: i32) -> (i32, i32) {
    %c0_i32 = arith.constant 0 : i32
    %c0_i32_0 = arith.constant 0 : i32
    return %arg0, %c0_i32 : i32, i32
  }
  func.func @transform_2(%arg0: i32) -> (i32, i32, i32) {
    %c0_i32 = arith.constant 0 : i32
    %c0_i32_0 = arith.constant 0 : i32
    %c0_i32_1 = arith.constant 0 : i32
    return %arg0, %c0_i32, %c0_i32_0 : i32, i32, i32
  }
}

</mosaic_0001>

<llo_original>
// kernel: tpu_custom_call.1
$region0: #{tpu_custom_call.1}
  #allocation0 [shape = 'u32[]', space=smem, size = 0x4, offset = 0x4, fixed_abs, tag = 'smem constant byte address 0x4 - core index']
  #allocation1 [shape = 'u32[144,128]{1,0:T(1,128)}', space=vmem, size = 0x12000, scoped, tag = 'internal scratch']
  %s0 = inlined_call_operand.hbm [shape: f32[8,4], index: 0, kind: input, shape index: {}]
  %s1 = inlined_call_operand.hbm [shape: f32[8,2], index: 1, kind: input, shape index: {}]
  %s2 = inlined_call_operand.hbm [shape: f32[1,8,128], index: 2, kind: output, shape index: {}]
  %s3 = sld [smem:[#allocation0]]
  $region26: #{tpu_custom_call.1} parent=0
    _
  %s5 = ssub.s32 1, %s3
  %s6 = scalar_select 0, %s5, %s3
  $region1: #{tpu_custom_call.1} parent=0
    #allocation2 [shape = 'u8[4096]{0}', space=vmem, size = 0x1000, scoped, tag = 'input window, operand 0, single buffered']
    #allocation3 [shape = 's32[1]{0}', space=sflag, size = 0x4, scoped, tag = 'scoped memory for tpu_custom_call.1']
    #allocation4 [shape = 's32[1]{0}', space=sflag, size = 0x4, scoped, tag = 'scoped memory for tpu_custom_call.1']
    #allocation5 [shape = 'u8[4096]{0}', space=vmem, size = 0x1000, scoped, tag = 'input window, operand 1, single buffered']
    #allocation6 [shape = 's32[1]{0}', space=sflag, size = 0x4, scoped, tag = 'scoped memory for tpu_custom_call.1']
    #allocation7 [shape = 'u8[4096]{0}', space=vmem, size = 0x1000, scoped, tag = 'output window, operand 0, single buffered']
    %7 = vsyncpa [#allocation3], 0
    %8 = vsyncpa [#allocation6], 0
    %9 = vsyncpa [#allocation4], 0
    // Predicated region
    $region2: #{tpu_custom_call.1} parent=1 // pred_check
      _
    $region3: #{tpu_custom_call.1} parent=1 // pred_check_branch
      %11 = sbr.rel (0) target = $region5
    $region4: #{tpu_custom_call.1} parent=1 // pred_region
      %s13 = ssub.s32 128, 128
      %14 = vsyncadd [#allocation3], %s13
      %s16 = sshll.u32 [#allocation2], 4
      %s17 = int_to_ptr.vmem [resolvable:$true] %s16
      %19 = dma.hbm_to_vmem [thread:$0]  %s0, 128, %s17, [#allocation3]
    $region5: #{tpu_custom_call.1} parent=1 // pred_fallthru
      _
    // Predicated region
    $region6: #{tpu_custom_call.1} parent=1 // pred_check
      _
    $region7: #{tpu_custom_call.1} parent=1 // pred_check_branch
      %21 = sbr.rel (0) target = $region9
    $region8: #{tpu_custom_call.1} parent=1 // pred_region
      %s23 = ssub.s32 128, 128
      %24 = vsyncadd [#allocation6], %s23
      %s26 = sshll.u32 [#allocation5], 4
      %s27 = int_to_ptr.vmem [resolvable:$true] %s26
      %29 = dma.hbm_to_vmem [thread:$0]  %s1, 128, %s27, [#allocation6]
    $region9: #{tpu_custom_call.1} parent=1 // pred_fallthru
      _
    // Predicated region
    $region10: #{tpu_custom_call.1} parent=1 // pred_check
      _
    $region11: #{tpu_custom_call.1} parent=1 // pred_check_branch
      %31 = sbr.rel (0) target = $region13
    $region12: #{tpu_custom_call.1} parent=1 // pred_region
      %32 = dma.done [#allocation3], 128
    $region13: #{tpu_custom_call.1} parent=1 // pred_fallthru
      _
    // Predicated region
    $region14: #{tpu_custom_call.1} parent=1 // pred_check
      _
    $region15: #{tpu_custom_call.1} parent=1 // pred_check_branch
      %34 = sbr.rel (0) target = $region17
    $region16: #{tpu_custom_call.1} parent=1 // pred_region
      %35 = dma.done [#allocation6], 128
    $region17: #{tpu_custom_call.1} parent=1 // pred_fallthru
      _
    %v36 = vld [vmem:[#allocation2] sm:$0xff]
    %v37 = vld [vmem:[#allocation5] sm:$0xff]
    %39 = vset.pattern.permute.xlu0 0
    %40 = vperm.xlu0 %39, %v37
    %v41 = vpop.permute.xlu0 %40
    %v43 = vmul.f32 %v36, %v41
    %vm44 = vcmask 31744
    %v45 = vsel %vm44, %v43, -inf
    %46 = vmax.xlane.f32.xlu0 %v45
    %v47 = vpop.xlane.xlu0 %46
    %v48 = vsub.f32 %v43, %v47
    %v49 = vmul.f32 %v48, 1.442695
    %v50 = vpow.pop %v49
    %v51 = vsel %vm44, %v50, 0.0
    %52 = vadd.xlane.f32.xlu0 %v51
    %v53 = vpop.xlane.xlu0 %52
    %v54 = vlog2.pop %v53
    %v55 = vmul.f32 %v54, 0.6931472
    %v56 = vadd.f32 %v47, %v55
    %v57 = vsub.f32 %v56, %v37
    %s58 = smul.u32 0, 8
    %v59 = vlaneseq
    %v60 = vshrl.u32 %v59, 7
    %v61 = vstv %s58
    %v62 = vadd.s32 %v61, %v60
    %vm63 = vcmp.lt.s32.totalorder %v62, 8
    %v64 = vsel %vm63, %v57, 0.0
    %66 = vrot.lane.b32.xlu0 %v64, 127
    %v67 = vpop.permute.xlu0 %66
    %vm69 = vcmask 7168
    %v70 = vsel %vm69, %v67, 0.0
    %71 = vadd.xlane.f32.xlu0 %v70
    %v72 = vpop.xlane.xlu0 %71
    %v73 = vrot.slane %v72, 4
    %v74 = vadd.f32 %v72, %v73
    %v75 = vrot.slane %v74, 2
    %v76 = vadd.f32 %v74, %v75
    %v77 = vrot.slane %v76, 1
    %v78 = vadd.f32 %v76, %v77
    %s79 = vtos %v78
    %v80 = vstv %s79
    %81 = vst [vmem:[#allocation7] sm:$0xff] %v80
    // Predicated region
    $region18: #{tpu_custom_call.1} parent=1 // pred_check
      _
    $region19: #{tpu_custom_call.1} parent=1 // pred_check_branch
      %83 = sbr.rel (0) target = $region21
    $region20: #{tpu_custom_call.1} parent=1 // pred_region
      %s85 = ssub.s32 128, 128
      %86 = vsyncadd [#allocation4], %s85
      %s88 = sshll.u32 [#allocation7], 4
      %s89 = int_to_ptr.vmem [resolvable:$true] %s88
      %91 = dma.vmem_to_hbm [thread:$0]  %s89, 128, %s2, [#allocation4]
    $region21: #{tpu_custom_call.1} parent=1 // pred_fallthru
      _
    // Predicated region
    $region22: #{tpu_custom_call.1} parent=1 // pred_check
      _
    $region23: #{tpu_custom_call.1} parent=1 // pred_check_branch
      %93 = sbr.rel (0) target = $region25
    $region24: #{tpu_custom_call.1} parent=1 // pred_region
      %94 = dma.done [#allocation4], 128
    $region25: #{tpu_custom_call.1} parent=1 // pred_fallthru
      _
    %95 = vsyncpa [#allocation3], 1
    %96 = vsyncpa [#allocation6], 1
    %97 = vsyncpa [#allocation4], 1

</llo_original>
